<compile_context>
chip_gen: v6e
topology: v6e:2x2x1
jax: 0.10.0
libtpu: 0.0.40
codegen_flags: <defaults>
</compile_context>

<pallas_src>
import functools

import jax
import jax.numpy as jnp
from jax.experimental import pallas as pl
from jax.experimental.pallas import tpu as pltpu


def _round_up(x, m):
    return ((x + m - 1) // m) * m


def _rpq_kernel(x_ref, proj_ref, cbt_ref, idx_ref, *, num_heads, codebook_dim,
                num_codes, c_chunk, eps_ln):
    # x_ref:    (tm, D)      token tile (native dtype)
    # proj_ref: (D, H*E)     fused random projections, bf16
    # cbt_ref:  (H, E, C)    pre-normalized, pre-transposed codebooks, bf16
    # idx_ref:  (H, tm)      output code indices (lane-dense: tokens on lanes)
    tm = x_ref.shape[0]
    d = x_ref.shape[1]
    x = x_ref[...].astype(jnp.float32)

    # LayerNorm over D, no affine, eps = 1e-5 (PyTorch default), biased variance.
    # Single pass over x: mean and E[x^2] accumulated together.
    inv_d = 1.0 / d
    mean = jnp.sum(x, axis=-1, keepdims=True) * inv_d
    meansq = jnp.sum(x * x, axis=-1, keepdims=True) * inv_d
    var = jnp.maximum(meansq - mean * mean, 0.0)
    xn = (x - mean) * jax.lax.rsqrt(var + eps_ln)

    # One fused projection matmul for all heads (bf16 operands, f32 accumulate):
    # (tm, D) @ (D, H*E) -> (tm, H*E)
    p_all = jnp.dot(xn.astype(jnp.bfloat16), proj_ref[...],
                    preferred_element_type=jnp.float32)

    # Hoisted iota, reused across heads / chunks (at most two distinct widths).
    iotas = {}

    def get_iota(width):
        if width not in iotas:
            iotas[width] = jax.lax.broadcasted_iota(jnp.int32, (tm, width), 1)
        return iotas[width]

    rows = []
    for head in range(num_heads):  # static, small loop over heads
        ph = p_all[:, head * codebook_dim:(head + 1) * codebook_dim]  # (tm, E)
        # Cosine-sim argmax: codebooks are unit-norm; normalizing ph is a strictly
        # positive per-row scale and cannot change the per-row argmax, so skip it.
        ph = ph.astype(jnp.bfloat16)

        run_max = jnp.full((tm, 1), -jnp.inf, dtype=jnp.float32)
        run_idx = jnp.zeros((tm, 1), dtype=jnp.int32)
        for c0 in range(0, num_codes, c_chunk):
            cw = min(c_chunk, num_codes - c0)
            cb_c = cbt_ref[head, :, c0:c0 + cw]                 # (E, cw) bf16
            sim_c = jnp.dot(ph, cb_c,
                            preferred_element_type=jnp.float32)  # (tm, cw)
            m_c = jnp.max(sim_c, axis=-1, keepdims=True)
            idx_c = jnp.min(jnp.where(sim_c == m_c, get_iota(cw), cw),
                            axis=-1, keepdims=True) + c0        # first match
            better = m_c > run_max      # strict: earlier chunk wins ties
            run_idx = jnp.where(better, idx_c, run_idx)
            run_max = jnp.maximum(run_max, m_c)
        rows.append(run_idx[:, 0])                              # (tm,) int32

    # Single unmasked (H, tm) store.
    idx_ref[...] = jnp.stack(rows, axis=0).astype(jnp.int32)


def random_projection_quantize(x, rand_projs, codebooks, *, tm=256,
                               c_chunk=1024, vmem_limit_bytes=None):
    """x: (B, N, D); rand_projs: (H, D, E); codebooks: (H, C, E) -> indices."""
    B, N, D = x.shape
    H, Dp, E = rand_projs.shape
    Hc, C, Ec = codebooks.shape
    assert D == Dp and H == Hc and E == Ec
    tokens = B * N

    # --- grid-invariant preprocessing (done once, outside the kernel) ---
    # Fuse per-head projections into one (D, H*E) matrix, in bf16.
    proj2d = jnp.transpose(rand_projs.astype(jnp.float32),
                           (1, 0, 2)).reshape(D, H * E).astype(jnp.bfloat16)
    # Normalize codebooks once, pre-transpose to (H, E, C) (K-sublane, N-lane), bf16.
    cb = codebooks.astype(jnp.float32)
    cb = cb / jnp.maximum(
        jnp.sqrt(jnp.sum(cb * cb, axis=-1, keepdims=True)), 1e-12)
    cbt = jnp.transpose(cb, (0, 2, 1)).astype(jnp.bfloat16)    # (H, E, C)

    # x stays in its native dtype; (B, N, D) -> (B*N, D) reshape is free.
    xf = x.reshape(tokens, D)

    # --- tile selection (no padding: Pallas masks the uneven last block) ---
    if tokens <= 128:
        tm = tokens                              # single block == full array dims
    else:
        tm = _round_up(min(tm, tokens), 128)     # keep output lane dim 128-aligned
        # v7x has 2 TensorCores: make sure the parallel token grid has >= 2 steps.
        tm = min(tm, _round_up(pl.cdiv(tokens, 2), 128))
    grid = pl.cdiv(tokens, tm)

    c_chunk = max(1, min(c_chunk, C))

    if vmem_limit_bytes is None:
        x_bytes = jnp.dtype(x.dtype).itemsize
        est = (2 * tm * D * x_bytes            # double-buffered token tile
               + D * H * E * 2                 # proj (bf16, single-buffered)
               + H * E * C * 2                 # codebooks (bf16, single-buffered)
               + 2 * H * tm * 4                # double-buffered idx output
               + tm * D * 4                    # xn (f32)
               + tm * H * E * 4                # p_all (f32)
               + 3 * tm * c_chunk * 4)         # per-chunk sim + reduce temporaries
        vmem_limit_bytes = min(max(2 * est, 16 * 1024 * 1024), 64 * 1024 * 1024)

    kernel = functools.partial(_rpq_kernel, num_heads=H, codebook_dim=E,
                               num_codes=C, c_chunk=c_chunk, eps_ln=1e-5)

    idx = pl.pallas_call(
        kernel,
        out_shape=jax.ShapeDtypeStruct((H, tokens), jnp.int32),
        grid_spec=pltpu.PrefetchScalarGridSpec(
            num_scalar_prefetch=0,
            grid=(grid,),
            in_specs=[
                pl.BlockSpec((tm, D), lambda i: (i, 0)),
                # Grid-invariant operands: single-buffer them (constant index_map,
                # double buffering would only waste VMEM).
                pl.BlockSpec((D, H * E), lambda i: (0, 0),
                             pipeline_mode=pl.Buffered(1)),
                pl.BlockSpec((H, E, C), lambda i: (0, 0, 0),
                             pipeline_mode=pl.Buffered(1)),
            ],
            out_specs=pl.BlockSpec((H, tm), lambda i: (0, i)),
        ),
        compiler_params=pltpu.CompilerParams(
            dimension_semantics=("parallel",),
            vmem_limit_bytes=vmem_limit_bytes),
    )(xf, proj2d, cbt)

    idx = jnp.transpose(idx).reshape(B, N, H)
    if H == 1:
        idx = idx[..., 0]  # single-head convention of vector-quantize-pytorch
    return idx


def _reference_sims(x, rand_projs, codebooks):
    """Faithful f32 reference similarities (B, N, H, C) of the module's forward."""
    mean = x.mean(-1, keepdims=True)
    var = ((x - mean) ** 2).mean(-1, keepdims=True)
    xn = (x - mean) * jax.lax.rsqrt(var + 1e-5)
    p = jnp.einsum('bnd,hde->bnhe', xn, rand_projs,
                   precision=jax.lax.Precision.HIGHEST)
    p = p / jnp.maximum(jnp.linalg.norm(p, axis=-1, keepdims=True), 1e-12)
    cb = codebooks / jnp.maximum(
        jnp.linalg.norm(codebooks, axis=-1, keepdims=True), 1e-12)
    return jnp.einsum('bnhe,hce->bnhc', p, cb,
                      precision=jax.lax.Precision.HIGHEST)


if __name__ == "__main__":
    # Small shapes consistent with the module's forward.
    B, N = 2, 8                 # batch, tokens
    dim = 32                    # input feature dim
    codebook_dim = 16           # projection dim per codebook
    codebook_size = 128         # codes per codebook
    num_codebooks = 2           # heads

    key = jax.random.PRNGKey(0)
    kx, kp, kc = jax.random.split(key, 3)

    x = jax.random.normal(kx, (B, N, dim), dtype=jnp.float32)

    # rand_projs: xavier_normal_ on (H, dim, codebook_dim)
    fan_in = dim * codebook_dim
    fan_out = num_codebooks * codebook_dim
    xavier_std = (2.0 / (fan_in + fan_out)) ** 0.5
    rand_projs = xavier_std * jax.random.normal(
        kp, (num_codebooks, dim, codebook_dim), dtype=jnp.float32)

    # Codebooks (l2-normalized random init, as in cosine-sim VQ).
    codebooks = jax.random.normal(
        kc, (num_codebooks, codebook_size, codebook_dim), dtype=jnp.float32)
    codebooks = codebooks / jnp.linalg.norm(codebooks, axis=-1, keepdims=True)

    indices = random_projection_quantize(x, rand_projs, codebooks, tm=256)
    indices = jax.block_until_ready(indices)

    # Validation: kernel matmuls run with bf16 MXU operands (f32 accumulation), so
    # compare against an f32-HIGHEST reference with a tie-tolerant criterion.
    sim_ref = _reference_sims(x, rand_projs, codebooks)       # (B, N, H, C)
    ref_idx = jnp.argmax(sim_ref, axis=-1).astype(jnp.int32)  # (B, N, H)

    assert indices.shape == ref_idx.shape, (indices.shape, ref_idx.shape)
    assert indices.dtype == jnp.int32

    chosen = jnp.take_along_axis(sim_ref, indices[..., None], axis=-1)[..., 0]
    best = jnp.max(sim_ref, axis=-1)
    near_optimal = bool(jnp.all(chosen >= best - 2e-2))
    match_frac = float(jnp.mean((indices == ref_idx).astype(jnp.float32)))

    assert near_optimal, "kernel picked codes far from the reference optimum"
    assert match_frac >= 0.75, f"too few exact index matches vs reference: {match_frac}"

    print("KERNEL_OK")
</pallas_src>

<mosaic_0001>
module attributes {stable_mosaic.version = 11 : i64} {
  func.func @_rpq_kernel(%arg0: i32, %arg1: memref<16x32xf32, #tpu.memory_space<vmem>>, %arg2: memref<32x32xbf16, #tpu.memory_space<vmem>>, %arg3: memref<2x16x128xbf16, #tpu.memory_space<vmem>>, %arg4: memref<2x16xi32, #tpu.memory_space<vmem>>) attributes {dimension_semantics = [#tpu.dimension_semantics<parallel>], iteration_bounds = array<i64: 1>, scalar_prefetch = 0 : i64, scratch_operands = 0 : i64, tpu.core_type = #tpu.core_type<tc>, window_params = [{transform_indices = @transform_0, window_bounds = array<i64: 16, 32>}, {pipeline_mode = #tpu.pipeline_mode<synchronous>, transform_indices = @transform_1, window_bounds = array<i64: 32, 32>}, {pipeline_mode = #tpu.pipeline_mode<synchronous>, transform_indices = @transform_2, window_bounds = array<i64: 2, 16, 128>}, {transform_indices = @transform_3, window_bounds = array<i64: 2, 16>}]} {
    %c0 = arith.constant 0 : index
    %c0_0 = arith.constant 0 : index
    %0 = vector.load %arg1[%c0, %c0_0] : memref<16x32xf32, #tpu.memory_space<vmem>>, vector<16x32xf32>
    %cst = arith.constant dense<0.000000e+00> : vector<16xf32>
    %1 = vector.multi_reduction <add>, %0, %cst [1] : vector<16x32xf32> to vector<16xf32>
    %2 = vector.shape_cast %1 : vector<16xf32> to vector<16x1xf32>
    %cst_1 = arith.constant 3.125000e-02 : f32
    %3 = vector.broadcast %cst_1 : f32 to vector<16x1xf32>
    %4 = arith.mulf %2, %3 : vector<16x1xf32>
    %5 = arith.mulf %0, %0 : vector<16x32xf32>
    %cst_2 = arith.constant dense<0.000000e+00> : vector<16xf32>
    %6 = vector.multi_reduction <add>, %5, %cst_2 [1] : vector<16x32xf32> to vector<16xf32>
    %7 = vector.shape_cast %6 : vector<16xf32> to vector<16x1xf32>
    %cst_3 = arith.constant 3.125000e-02 : f32
    %8 = vector.broadcast %cst_3 : f32 to vector<16x1xf32>
    %9 = arith.mulf %7, %8 : vector<16x1xf32>
    %10 = arith.mulf %4, %4 : vector<16x1xf32>
    %11 = arith.subf %9, %10 : vector<16x1xf32>
    %cst_4 = arith.constant 0.000000e+00 : f32
    %12 = vector.broadcast %cst_4 : f32 to vector<16x1xf32>
    %13 = arith.maximumf %11, %12 : vector<16x1xf32>
    %14 = vector.broadcast %4 : vector<16x1xf32> to vector<16x32xf32>
    %15 = arith.subf %0, %14 : vector<16x32xf32>
    %cst_5 = arith.constant 9.99999974E-6 : f32
    %16 = vector.broadcast %cst_5 : f32 to vector<16x1xf32>
    %17 = arith.addf %13, %16 : vector<16x1xf32>
    %18 = math.rsqrt %17 : vector<16x1xf32>
    %19 = vector.broadcast %18 : vector<16x1xf32> to vector<16x32xf32>
    %20 = arith.mulf %15, %19 : vector<16x32xf32>
    %21 = arith.truncf %20 : vector<16x32xf32> to vector<16x32xbf16>
    %c0_6 = arith.constant 0 : index
    %c0_7 = arith.constant 0 : index
    %22 = vector.load %arg2[%c0_6, %c0_7] : memref<32x32xbf16, #tpu.memory_space<vmem>>, vector<32x32xbf16>
    %cst_8 = arith.constant dense<0.000000e+00> : vector<16x32xf32>
    %23 = tpu.matmul %21, %22, %cst_8 {dimension_numbers = #tpu.dot_dimension_numbers<[1], [0], [0], [1], [0, 0, 1, 1], [], []>} : vector<16x32xbf16>, vector<32x32xbf16>, vector<16x32xf32> -> vector<16x32xf32>
    %24 = vector.extract_strided_slice %23 {offsets = [0, 0], sizes = [16, 16], strides = [1, 1]} : vector<16x32xf32> to vector<16x16xf32>
    %25 = arith.truncf %24 : vector<16x16xf32> to vector<16x16xbf16>
    %cst_9 = arith.constant 0xFF800000 : f32
    %26 = vector.broadcast %cst_9 : f32 to vector<16x1xf32>
    %c0_i32 = arith.constant 0 : i32
    %27 = vector.broadcast %c0_i32 : i32 to vector<16x1xi32>
    %c0_10 = arith.constant 0 : index
    %c0_11 = arith.constant 0 : index
    %c0_12 = arith.constant 0 : index
    %28 = vector.load %arg3[%c0_10, %c0_11, %c0_12] : memref<2x16x128xbf16, #tpu.memory_space<vmem>>, vector<1x16x128xbf16>
    %29 = vector.shape_cast %28 : vector<1x16x128xbf16> to vector<16x128xbf16>
    %cst_13 = arith.constant dense<0.000000e+00> : vector<16x128xf32>
    %30 = tpu.matmul %25, %29, %cst_13 {dimension_numbers = #tpu.dot_dimension_numbers<[1], [0], [0], [1], [0, 0, 1, 1], [], []>} : vector<16x16xbf16>, vector<16x128xbf16>, vector<16x128xf32> -> vector<16x128xf32>
    %cst_14 = arith.constant dense<0xFF800000> : vector<16xf32>
    %31 = vector.multi_reduction <maximumf>, %30, %cst_14 [1] : vector<16x128xf32> to vector<16xf32>
    %32 = vector.shape_cast %31 : vector<16xf32> to vector<16x1xf32>
    %33 = vector.broadcast %32 : vector<16x1xf32> to vector<16x128xf32>
    %34 = arith.cmpf oeq, %30, %33 : vector<16x128xf32>
    %35 = tpu.iota {dimensions = array<i32: 1>} : vector<16x128xi32>
    %c128_i32 = arith.constant 128 : i32
    %36 = vector.broadcast %c128_i32 : i32 to vector<16x128xi32>
    %37 = arith.select %34, %35, %36 : vector<16x128xi1>, vector<16x128xi32>
    %cst_15 = arith.constant dense<2147483647> : vector<16xi32>
    %38 = vector.multi_reduction <minsi>, %37, %cst_15 [1] : vector<16x128xi32> to vector<16xi32>
    %39 = vector.shape_cast %38 : vector<16xi32> to vector<16x1xi32>
    %c0_i32_16 = arith.constant 0 : i32
    %40 = vector.broadcast %c0_i32_16 : i32 to vector<16x1xi32>
    %41 = arith.addi %39, %40 : vector<16x1xi32>
    %42 = arith.cmpf ogt, %32, %26 : vector<16x1xf32>
    %43 = arith.select %42, %41, %27 : vector<16x1xi1>, vector<16x1xi32>
    %44 = vector.shape_cast %43 : vector<16x1xi32> to vector<16xi32>
    %45 = vector.extract_strided_slice %23 {offsets = [0, 16], sizes = [16, 16], strides = [1, 1]} : vector<16x32xf32> to vector<16x16xf32>
    %46 = arith.truncf %45 : vector<16x16xf32> to vector<16x16xbf16>
    %cst_17 = arith.constant 0xFF800000 : f32
    %47 = vector.broadcast %cst_17 : f32 to vector<16x1xf32>
    %c0_i32_18 = arith.constant 0 : i32
    %48 = vector.broadcast %c0_i32_18 : i32 to vector<16x1xi32>
    %c1 = arith.constant 1 : index
    %c0_19 = arith.constant 0 : index
    %c0_20 = arith.constant 0 : index
    %49 = vector.load %arg3[%c1, %c0_19, %c0_20] : memref<2x16x128xbf16, #tpu.memory_space<vmem>>, vector<1x16x128xbf16>
    %50 = vector.shape_cast %49 : vector<1x16x128xbf16> to vector<16x128xbf16>
    %cst_21 = arith.constant dense<0.000000e+00> : vector<16x128xf32>
    %51 = tpu.matmul %46, %50, %cst_21 {dimension_numbers = #tpu.dot_dimension_numbers<[1], [0], [0], [1], [0, 0, 1, 1], [], []>} : vector<16x16xbf16>, vector<16x128xbf16>, vector<16x128xf32> -> vector<16x128xf32>
    %cst_22 = arith.constant dense<0xFF800000> : vector<16xf32>
    %52 = vector.multi_reduction <maximumf>, %51, %cst_22 [1] : vector<16x128xf32> to vector<16xf32>
    %53 = vector.shape_cast %52 : vector<16xf32> to vector<16x1xf32>
    %54 = vector.broadcast %53 : vector<16x1xf32> to vector<16x128xf32>
    %55 = arith.cmpf oeq, %51, %54 : vector<16x128xf32>
    %c128_i32_23 = arith.constant 128 : i32
    %56 = vector.broadcast %c128_i32_23 : i32 to vector<16x128xi32>
    %57 = arith.select %55, %35, %56 : vector<16x128xi1>, vector<16x128xi32>
    %cst_24 = arith.constant dense<2147483647> : vector<16xi32>
    %58 = vector.multi_reduction <minsi>, %57, %cst_24 [1] : vector<16x128xi32> to vector<16xi32>
    %59 = vector.shape_cast %58 : vector<16xi32> to vector<16x1xi32>
    %c0_i32_25 = arith.constant 0 : i32
    %60 = vector.broadcast %c0_i32_25 : i32 to vector<16x1xi32>
    %61 = arith.addi %59, %60 : vector<16x1xi32>
    %62 = arith.cmpf ogt, %53, %47 : vector<16x1xf32>
    %63 = arith.select %62, %61, %48 : vector<16x1xi1>, vector<16x1xi32>
    %64 = vector.shape_cast %63 : vector<16x1xi32> to vector<16xi32>
    %65 = vector.shape_cast %44 : vector<16xi32> to vector<1x16xi32>
    %66 = vector.shape_cast %64 : vector<16xi32> to vector<1x16xi32>
    %67 = tpu.concatenate %65, %66 in 0 : vector<1x16xi32>, vector<1x16xi32> -> vector<2x16xi32>
    %c0_26 = arith.constant 0 : index
    %c0_27 = arith.constant 0 : index
    %68 = vector.load %arg4[%c0_26, %c0_27] : memref<2x16xi32, #tpu.memory_space<vmem>>, vector<2x16xi32>
    tpu.vector_store %arg4[%c0_26, %c0_27], %67 {strides = array<i32>} : memref<2x16xi32, #tpu.memory_space<vmem>>, vector<2x16xi32>,
    return
  }
  func.func @transform_0(%arg0: i32) -> (i32, i32) {
    %c0_i32 = arith.constant 0 : i32
    %c0_i32_0 = arith.constant 0 : i32
    return %arg0, %c0_i32 : i32, i32
  }
  func.func @transform_1(%arg0: i32) -> (i32, i32) {
    %c0_i32 = arith.constant 0 : i32
    %c0_i32_0 = arith.constant 0 : i32
    %c0_i32_1 = arith.constant 0 : i32
    return %c0_i32, %c0_i32_0 : i32, i32
  }
  func.func @transform_2(%arg0: i32) -> (i32, i32, i32) {
    %c0_i32 = arith.constant 0 : i32
    %c0_i32_0 = arith.constant 0 : i32
    %c0_i32_1 = arith.constant 0 : i32
    %c0_i32_2 = arith.constant 0 : i32
    return %c0_i32, %c0_i32_0, %c0_i32_1 : i32, i32, i32
  }
  func.func @transform_3(%arg0: i32) -> (i32, i32) {
    %c0_i32 = arith.constant 0 : i32
    %c0_i32_0 = arith.constant 0 : i32
    return %c0_i32, %arg0 : i32, i32
  }
}

</mosaic_0001>

<llo_original>
// kernel: tpu_custom_call.1
$region0: #{tpu_custom_call.1}
  #allocation0 [shape = 'u32[]', space=smem, size = 0x4, offset = 0x4, fixed_abs, tag = 'smem constant byte address 0x4 - core index']
  #allocation1 [shape = 'u32[144,128]{1,0:T(1,128)}', space=vmem, size = 0x12000, scoped, tag = 'internal scratch']
  %s0 = inlined_call_operand.hbm [shape: f32[16,32], index: 0, kind: input, shape index: {}]
  %s1 = inlined_call_operand.hbm [shape: bf16[32,32], index: 1, kind: input, shape index: {}]
  %s2 = inlined_call_operand.hbm [shape: bf16[2,16,128], index: 2, kind: input, shape index: {}]
  %s3 = inlined_call_operand.hbm [shape: s32[2,16], index: 3, kind: output, shape index: {}]
  %s4 = sld [smem:[#allocation0]]
  $region34: #{tpu_custom_call.1} parent=0
    _
  %s6 = ssub.s32 1, %s4
  %s7 = scalar_select 0, %s6, %s4
  $region1: #{tpu_custom_call.1} parent=0
    #allocation2 [shape = 'u8[8192]{0}', space=vmem, size = 0x2000, scoped, tag = 'input window, operand 0, single buffered']
    #allocation3 [shape = 's32[1]{0}', space=sflag, size = 0x4, scoped, tag = 'scoped memory for tpu_custom_call.1']
    #allocation4 [shape = 's32[1]{0}', space=sflag, size = 0x4, scoped, tag = 'scoped memory for tpu_custom_call.1']
    #allocation5 [shape = 'u8[8192]{0}', space=vmem, size = 0x2000, scoped, tag = 'input window, operand 1, single buffered']
    #allocation6 [shape = 's32[1]{0}', space=sflag, size = 0x4, scoped, tag = 'scoped memory for tpu_custom_call.1']
    #allocation7 [shape = 'u8[8192]{0}', space=vmem, size = 0x2000, scoped, tag = 'input window, operand 2, single buffered']
    #allocation8 [shape = 'u8[1024]{0}', space=vmem, size = 0x400, scoped, tag = 'output window, operand 0, single buffered']
    %8 = vsyncpa [#allocation3], 0
    %9 = vsyncpa [#allocation6], 0
    %10 = vsyncpa [#allocation4], 0
    // Predicated region
    $region2: #{tpu_custom_call.1} parent=1 // pred_check
      _
    $region3: #{tpu_custom_call.1} parent=1 // pred_check_branch
      %12 = sbr.rel (0) target = $region5
    $region4: #{tpu_custom_call.1} parent=1 // pred_region
      %s14 = ssub.s32 256, 256
      %15 = vsyncadd [#allocation3], %s14
      %s16 = sshll.u32 [#allocation2], 4
      %s17 = int_to_ptr.vmem [resolvable:$true] %s16
      %22 = dma.hbm_to_vmem [thread:$0]  %s0, 256, %s17, [#allocation3], 128, 128, 8
    $region5: #{tpu_custom_call.1} parent=1 // pred_fallthru
      _
    // Predicated region
    $region6: #{tpu_custom_call.1} parent=1 // pred_check
      _
    $region7: #{tpu_custom_call.1} parent=1 // pred_check_branch
      %24 = sbr.rel (0) target = $region9
    $region8: #{tpu_custom_call.1} parent=1 // pred_region
      %s26 = ssub.s32 256, 256
      %27 = vsyncadd [#allocation6], %s26
      %s28 = sshll.u32 [#allocation5], 4
      %s29 = int_to_ptr.vmem [resolvable:$true] %s28
      %34 = dma.hbm_to_vmem [thread:$0]  %s1, 256, %s29, [#allocation6], 64, 64, 4
    $region9: #{tpu_custom_call.1} parent=1 // pred_fallthru
      _
    // Predicated region
    $region10: #{tpu_custom_call.1} parent=1 // pred_check
      _
    $region11: #{tpu_custom_call.1} parent=1 // pred_check_branch
      %36 = sbr.rel (0) target = $region13
    $region12: #{tpu_custom_call.1} parent=1 // pred_region
      %s38 = ssub.s32 256, 256
      %39 = vsyncadd [#allocation6], %s38
      %s40 = sshll.u32 [#allocation7], 4
      %s41 = int_to_ptr.vmem [resolvable:$true] %s40
      %46 = dma.hbm_to_vmem [thread:$0]  %s2, 256, %s41, [#allocation6], 64, 64, 4
    $region13: #{tpu_custom_call.1} parent=1 // pred_fallthru
      _
    // Predicated region
    $region14: #{tpu_custom_call.1} parent=1 // pred_check
      _
    $region15: #{tpu_custom_call.1} parent=1 // pred_check_branch
      %48 = sbr.rel (0) target = $region17
    $region16: #{tpu_custom_call.1} parent=1 // pred_region
      %49 = dma.done [#allocation3], 256
    $region17: #{tpu_custom_call.1} parent=1 // pred_fallthru
      _
    // Predicated region
    $region18: #{tpu_custom_call.1} parent=1 // pred_check
      _
    $region19: #{tpu_custom_call.1} parent=1 // pred_check_branch
      %51 = sbr.rel (0) target = $region21
    $region20: #{tpu_custom_call.1} parent=1 // pred_region
      %52 = dma.done [#allocation6], 256
    $region21: #{tpu_custom_call.1} parent=1 // pred_fallthru
      _
    // Predicated region
    $region22: #{tpu_custom_call.1} parent=1 // pred_check
      _
    $region23: #{tpu_custom_call.1} parent=1 // pred_check_branch
      %54 = sbr.rel (0) target = $region25
    $region24: #{tpu_custom_call.1} parent=1 // pred_region
      %55 = dma.done [#allocation6], 256
    $region25: #{tpu_custom_call.1} parent=1 // pred_fallthru
      _
    %v57 = vld [vmem:[#allocation2] sm:$0xff]
    %v58 = vld [vmem:[#allocation2 + $0x8] sm:$0xff]
    %vm59 = vcmask 261120
    %v60 = vsel %vm59, %v57, 0.0
    %61 = vadd.xlane.f32.xlu0 %v60
    %v62 = vpop.xlane.xlu0 %61
    %v63 = vsel %vm59, %v58, 0.0
    %64 = vadd.xlane.f32.xlu0 %v63
    %v65 = vpop.xlane.xlu0 %64
    %v66 = vmul.f32 %v62, 0.03125
    %v67 = vmul.f32 %v65, 0.03125
    %v68 = vmul.f32 %v57, %v57
    %v69 = vmul.f32 %v58, %v58
    %v70 = vsel %vm59, %v68, 0.0
    %71 = vadd.xlane.f32.xlu0 %v70
    %v72 = vpop.xlane.xlu0 %71
    %v73 = vsel %vm59, %v69, 0.0
    %74 = vadd.xlane.f32.xlu0 %v73
    %v75 = vpop.xlane.xlu0 %74
    %v76 = vmul.f32 %v72, 0.03125
    %v77 = vmul.f32 %v75, 0.03125
    %v78 = vmul.f32 %v66, %v66
    %v79 = vmul.f32 %v67, %v67
    %v80 = vsub.f32 %v76, %v78
    %v81 = vsub.f32 %v77, %v79
    %v82 = vmax.f32 %v80, 0.0
    %v83 = vmax.f32 %v81, 0.0
    %v84 = vsub.f32 %v57, %v66
    %v85 = vsub.f32 %v58, %v67
    %v86 = vadd.f32 %v82, 1e-05
    %v87 = vadd.f32 %v83, 1e-05
    %v88 = vrsqrt.pop %v86
    %v89 = vrsqrt.pop %v87
    %v90 = vmul.f32 %v84, %v88
    %v91 = vmul.f32 %v85, %v89
    %v92 = vpack.c.bf16 %v91, %v90
    %v93 = vld [vmem:[#allocation5] sm:$0xf]
    %v94 = vld [vmem:[#allocation5 + $0x4] sm:$0xf]
    %v95 = vld [vmem:[#allocation5 + $0x8] sm:$0xf]
    %v96 = vld [vmem:[#allocation5 + $0xc] sm:$0xf]
    %v101 = vunpack.c.l.b16 %v93
    %v102 = vunpack.c.l.b16 %v94
    %v103 = vunpack.c.l.b16 %v95
    %v104 = vunpack.c.l.b16 %v96
    %v105 = vpack.c.b16 %v102, %v101
    %v106 = vpack.c.b16 %v104, %v103
    %v110 = vsel %vm59, %v92, 0
    %112 = vmatprep.subr.bf16.mxu0 0
    %113 = vmatpush1.bf16.msra.mxu0 0
    %114 = vmatprep.subr.bf16.mxu0 0
    %115 = vmatpush1.bf16.msra.mxu0 0
    %116 = vmatprep.subr.bf16.mxu0 0
    %117 = vmatpush1.bf16.msra.mxu0 0
    %118 = vmatprep.subr.bf16.mxu0 0
    %119 = vmatpush1.bf16.msra.mxu0 0
    %120 = vmatprep.subr.bf16.mxu0 0
    %121 = vmatpush1.bf16.msra.mxu0 0
    %122 = vmatprep.subr.bf16.mxu0 0
    %123 = vmatpush1.bf16.msra.mxu0 0
    %124 = vmatprep.subr.bf16.mxu0 0
    %125 = vmatpush1.bf16.msra.mxu0 %v106
    %126 = vmatprep.subr.bf16.mxu0 0
    %127 = vmatpush1.bf16.msra.mxu0 %v105
    %128 = vmatprep.subr.bf16.mxu0 0
    %129 = vmatpush2.bf16.msra.mxu0 0
    %130 = vmatprep.subr.bf16.mxu0 0
    %131 = vmatpush2.bf16.msra.mxu0 0
    %132 = vmatprep.subr.bf16.mxu0 0
    %133 = vmatpush2.bf16.msra.mxu0 0
    %134 = vmatprep.subr.bf16.mxu0 0
    %135 = vmatpush2.bf16.msra.mxu0 0
    %136 = vmatprep.subr.bf16.mxu0 0
    %137 = vmatpush2.bf16.msra.mxu0 0
    %138 = vmatprep.subr.bf16.mxu0 0
    %139 = vmatpush2.bf16.msra.mxu0 0
    %140 = vmatprep.subr.bf16.mxu0 0
    %141 = vmatpush2.bf16.msra.mxu0 0
    %142 = vmatprep.subr.bf16.mxu0 0
    %143 = vmatpush2.bf16.msra.mxu0 0
    %144 = vmatprep.mubr.bf16.mxu0 0
    %145 = vmatmul.mubr.bf16.gmra.mxu0 %v110
    %v146 = vpop.f32.mrf.mxu0
    %v147 = vadd.f32 0.0, %v146
    %v148 = vpop.f32.mrf.mxu0
    %v149 = vpop.f32.mrf.mxu0
    %v150 = vadd.f32 0.0, %v149
    %v151 = vpop.f32.mrf.mxu0
    %152 = vdwg.mxu0
    %v153 = vpack.c.bf16 %v150, %v147
    %v154 = vld [vmem:[#allocation7] sm:$0xf]
    %v155 = vld [vmem:[#allocation7 + $0x4] sm:$0xf]
    %v158 = vunpack.c.l.b16 %v154
    %v159 = vunpack.c.l.b16 %v155
    %v160 = vpack.c.b16 %v159, %v158
    %vm162 = vcmask 130048
    %v164 = vsel %vm162, %v153, 0
    %166 = vmatprep.subr.bf16.mxu0 0
    %167 = vmatpush1.bf16.msra.mxu0 0
    %168 = vmatprep.subr.bf16.mxu0 0
    %169 = vmatpush1.bf16.msra.mxu0 0
    %170 = vmatprep.subr.bf16.mxu0 0
    %171 = vmatpush1.bf16.msra.mxu0 0
    %172 = vmatprep.subr.bf16.mxu0 0
    %173 = vmatpush1.bf16.msra.mxu0 0
    %174 = vmatprep.subr.bf16.mxu0 0
    %175 = vmatpush1.bf16.msra.mxu0 0
    %176 = vmatprep.subr.bf16.mxu0 0
    %177 = vmatpush1.bf16.msra.mxu0 0
    %178 = vmatprep.subr.bf16.mxu0 0
    %179 = vmatpush1.bf16.msra.mxu0 0
    %180 = vmatprep.subr.bf16.mxu0 0
    %181 = vmatpush1.bf16.msra.mxu0 %v160
    %182 = vmatprep.subr.bf16.mxu0 0
    %183 = vmatpush2.bf16.msra.mxu0 0
    %184 = vmatprep.subr.bf16.mxu0 0
    %185 = vmatpush2.bf16.msra.mxu0 0
    %186 = vmatprep.subr.bf16.mxu0 0
    %187 = vmatpush2.bf16.msra.mxu0 0
    %188 = vmatprep.subr.bf16.mxu0 0
    %189 = vmatpush2.bf16.msra.mxu0 0
    %190 = vmatprep.subr.bf16.mxu0 0
    %191 = vmatpush2.bf16.msra.mxu0 0
    %192 = vmatprep.subr.bf16.mxu0 0
    %193 = vmatpush2.bf16.msra.mxu0 0
    %194 = vmatprep.subr.bf16.mxu0 0
    %195 = vmatpush2.bf16.msra.mxu0 0
    %196 = vmatprep.subr.bf16.mxu0 0
    %197 = vmatpush2.bf16.msra.mxu0 0
    %198 = vmatprep.mubr.bf16.mxu0 0
    %199 = vmatmul.mubr.bf16.gmra.mxu0 %v164
    %v200 = vpop.f32.mrf.mxu0
    %v201 = vadd.f32 0.0, %v200
    %v202 = vpop.f32.mrf.mxu0
    %v203 = vpop.f32.mrf.mxu0
    %v204 = vadd.f32 0.0, %v203
    %v205 = vpop.f32.mrf.mxu0
    %206 = vdwg.mxu0
    %207 = vmax.xlane.f32.xlu0 %v201
    %v208 = vpop.xlane.xlu0 %207
    %209 = vmax.xlane.f32.xlu0 %v204
    %v210 = vpop.xlane.xlu0 %209
    %vm211 = vcmp.eq.f32.partialorder %v201, %v208
    %vm212 = vcmp.eq.f32.partialorder %v204, %v210
    %v213 = vlaneseq
    %v214 = vand.u32 %v213, 127
    %v215 = vsel %vm211, %v214, 128
    %v216 = vsel %vm212, %v214, 128
    %v217 = vand.u32 %v215, 65535
    %v218 = vshra.s32 %v215, 16
    %v219 = vcvt.s32.f32 %v217
    %v220 = vcvt.s32.f32 %v218
    %221 = vmin.xlane.f32.xlu0 %v220
    %v222 = vpop.xlane.xlu0 %221
    %vm223 = vcmp.eq.f32.partialorder %v220, %v222
    %v224 = vsel %vm223, %v219, inf
    %225 = vmin.xlane.f32.xlu0 %v224
    %v226 = vpop.xlane.xlu0 %225
    %v227 = vcvt.f32.s32 %v226
    %v228 = vcvt.f32.s32 %v222
    %v229 = vshll.u32 %v228, 16
    %v230 = vadd.s32 %v229, %v227
    %v231 = vand.u32 %v216, 65535
    %v232 = vshra.s32 %v216, 16
    %v233 = vcvt.s32.f32 %v231
    %v234 = vcvt.s32.f32 %v232
    %235 = vmin.xlane.f32.xlu0 %v234
    %v236 = vpop.xlane.xlu0 %235
    %vm237 = vcmp.eq.f32.partialorder %v234, %v236
    %v238 = vsel %vm237, %v233, inf
    %239 = vmin.xlane.f32.xlu0 %v238
    %v240 = vpop.xlane.xlu0 %239
    %v241 = vcvt.f32.s32 %v240
    %v242 = vcvt.f32.s32 %v236
    %v243 = vshll.u32 %v242, 16
    %v244 = vadd.s32 %v243, %v241
    %vm245 = vcmp.gt.f32.partialorder %v208, -inf
    %vm246 = vcmp.gt.f32.partialorder %v210, -inf
    %v247 = vsel %vm245, %v230, 0
    %v248 = vsel %vm246, %v244, 0
    %s249 = scalar_lea.vmem [#allocation7], 8
    %v250 = vld [vmem:[%s249] sm:$0xf]
    %v251 = vld [vmem:[%s249 + $0x4] sm:$0xf]
    %253 = vrot.lane.b32.xlu0 %v153, 112
    %v254 = vpop.permute.xlu0 %253
    %v257 = vunpack.c.l.b16 %v250
    %v258 = vunpack.c.l.b16 %v251
    %v259 = vpack.c.b16 %v258, %v257
    %v262 = vsel %vm162, %v254, 0
    %264 = vmatprep.subr.bf16.mxu0 0
    %265 = vmatpush1.bf16.msra.mxu0 0
    %266 = vmatprep.subr.bf16.mxu0 0
    %267 = vmatpush1.bf16.msra.mxu0 0
    %268 = vmatprep.subr.bf16.mxu0 0
    %269 = vmatpush1.bf16.msra.mxu0 0
    %270 = vmatprep.subr.bf16.mxu0 0
    %271 = vmatpush1.bf16.msra.mxu0 0
    %272 = vmatprep.subr.bf16.mxu0 0
    %273 = vmatpush1.bf16.msra.mxu0 0
    %274 = vmatprep.subr.bf16.mxu0 0
    %275 = vmatpush1.bf16.msra.mxu0 0
    %276 = vmatprep.subr.bf16.mxu0 0
    %277 = vmatpush1.bf16.msra.mxu0 0
    %278 = vmatprep.subr.bf16.mxu0 0
    %279 = vmatpush1.bf16.msra.mxu0 %v259
    %280 = vmatprep.subr.bf16.mxu0 0
    %281 = vmatpush2.bf16.msra.mxu0 0
    %282 = vmatprep.subr.bf16.mxu0 0
    %283 = vmatpush2.bf16.msra.mxu0 0
    %284 = vmatprep.subr.bf16.mxu0 0
    %285 = vmatpush2.bf16.msra.mxu0 0
    %286 = vmatprep.subr.bf16.mxu0 0
    %287 = vmatpush2.bf16.msra.mxu0 0
    %288 = vmatprep.subr.bf16.mxu0 0
    %289 = vmatpush2.bf16.msra.mxu0 0
    %290 = vmatprep.subr.bf16.mxu0 0
    %291 = vmatpush2.bf16.msra.mxu0 0
    %292 = vmatprep.subr.bf16.mxu0 0
    %293 = vmatpush2.bf16.msra.mxu0 0
    %294 = vmatprep.subr.bf16.mxu0 0
    %295 = vmatpush2.bf16.msra.mxu0 0
    %296 = vmatprep.mubr.bf16.mxu0 0
    %297 = vmatmul.mubr.bf16.gmra.mxu0 %v262
    %v298 = vpop.f32.mrf.mxu0
    %v299 = vadd.f32 0.0, %v298
    %v300 = vpop.f32.mrf.mxu0
    %v301 = vpop.f32.mrf.mxu0
    %v302 = vadd.f32 0.0, %v301
    %v303 = vpop.f32.mrf.mxu0
    %304 = vdwg.mxu0
    %305 = vmax.xlane.f32.xlu0 %v299
    %v306 = vpop.xlane.xlu0 %305
    %307 = vmax.xlane.f32.xlu0 %v302
    %v308 = vpop.xlane.xlu0 %307
    %vm309 = vcmp.eq.f32.partialorder %v299, %v306
    %vm310 = vcmp.eq.f32.partialorder %v302, %v308
    %v311 = vsel %vm309, %v214, 128
    %v312 = vsel %vm310, %v214, 128
    %v313 = vand.u32 %v311, 65535
    %v314 = vshra.s32 %v311, 16
    %v315 = vcvt.s32.f32 %v313
    %v316 = vcvt.s32.f32 %v314
    %317 = vmin.xlane.f32.xlu0 %v316
    %v318 = vpop.xlane.xlu0 %317
    %vm319 = vcmp.eq.f32.partialorder %v316, %v318
    %v320 = vsel %vm319, %v315, inf
    %321 = vmin.xlane.f32.xlu0 %v320
    %v322 = vpop.xlane.xlu0 %321
    %v323 = vcvt.f32.s32 %v322
    %v324 = vcvt.f32.s32 %v318
    %v325 = vshll.u32 %v324, 16
    %v326 = vadd.s32 %v325, %v323
    %v327 = vand.u32 %v312, 65535
    %v328 = vshra.s32 %v312, 16
    %v329 = vcvt.s32.f32 %v327
    %v330 = vcvt.s32.f32 %v328
    %331 = vmin.xlane.f32.xlu0 %v330
    %v332 = vpop.xlane.xlu0 %331
    %vm333 = vcmp.eq.f32.partialorder %v330, %v332
    %v334 = vsel %vm333, %v329, inf
    %335 = vmin.xlane.f32.xlu0 %v334
    %v336 = vpop.xlane.xlu0 %335
    %v337 = vcvt.f32.s32 %v336
    %v338 = vcvt.f32.s32 %v332
    %v339 = vshll.u32 %v338, 16
    %v340 = vadd.s32 %v339, %v337
    %vm341 = vcmp.gt.f32.partialorder %v306, -inf
    %vm342 = vcmp.gt.f32.partialorder %v308, -inf
    %v343 = vsel %vm341, %v326, 0
    %v344 = vsel %vm342, %v340, 0
    %v345 = vlaneseq
    %v346 = vshrl.u32 %v345, 7
    %v347 = vsub.s32 %v214, %v346
    %v348 = vrot.slane %v247, %v347
    %v349 = vadd.s32 %v214, 4294967288
    %v350 = vlaneseq
    %v351 = vshrl.u32 %v350, 7
    %v352 = vsub.s32 %v349, %v351
    %v353 = vrot.slane %v248, %v352
    %vm354 = vcmask 130112
    %v355 = vsel %vm354, %v353, %v348
    %v356 = vlaneseq
    %v357 = vshrl.u32 %v356, 7
    %v358 = vsub.s32 %v214, %v357
    %v359 = vrot.slane %v343, %v358
    %v360 = vlaneseq
    %v361 = vshrl.u32 %v360, 7
    %v362 = vsub.s32 %v349, %v361
    %v363 = vrot.slane %v344, %v362
    %v364 = vsel %vm354, %v363, %v359
    %vm365 = vcmask 1040384
    %v366 = vsel %vm365, %v355, %v364
    %vm367 = vcmask 123904
    %368 = vst.msk [vmem:[#allocation8] sm:$0x3] %vm367, %v366
    // Predicated region
    $region26: #{tpu_custom_call.1} parent=1 // pred_check
      _
    $region27: #{tpu_custom_call.1} parent=1 // pred_check_branch
      %370 = sbr.rel (0) target = $region29
    $region28: #{tpu_custom_call.1} parent=1 // pred_region
      %s372 = ssub.s32 32, 32
      %373 = vsyncadd [#allocation4], %s372
      %s375 = sshll.u32 [#allocation8], 4
      %s376 = int_to_ptr.vmem [resolvable:$true] %s375
      %378 = dma.vmem_to_hbm [thread:$0]  %s376, 32, %s3, [#allocation4]
    $region29: #{tpu_custom_call.1} parent=1 // pred_fallthru
      _
    // Predicated region
    $region30: #{tpu_custom_call.1} parent=1 // pred_check
      _
    $region31: #{tpu_custom_call.1} parent=1 // pred_check_branch
      %380 = sbr.rel (0) target = $region33
    $region32: #{tpu_custom_call.1} parent=1 // pred_region
      %381 = dma.done [#allocation4], 32
    $region33: #{tpu_custom_call.1} parent=1 // pred_fallthru
      _
    %382 = vsyncpa [#allocation3], 1
    %383 = vsyncpa [#allocation6], 1
    %384 = vsyncpa [#allocation4], 1

</llo_original>
